<compile_context>
chip_gen: v7x
topology: tpu7x:2x2x1
jax: 0.10.0
libtpu: 0.0.40
codegen_flags: <defaults>
</compile_context>

<pallas_src>
import jax
import jax.numpy as jnp
from jax.experimental import pallas as pl
from jax.experimental.pallas import tpu as pltpu


def _round_up(x, m):
    return (x + m - 1) // m * m


def rec_kernel(slab_ref, wht_ref, bh_ref, woh_ref, out_ref):
    # slab_ref: (O+1, TB)  rows 0..O-1 = others^T, row O = user/movie scores + b_out
    # wht_ref : (H, O)     hidden weight (transposed, so batch stays on lanes)
    # bh_ref  : (H, 1)     hidden bias
    # woh_ref : (H, 1)     output-layer weights for the hidden block
    # out_ref : (1, TB)    predictions, batch on lanes
    O = wht_ref.shape[1]
    x = slab_ref[:O, :]                                    # (O, TB)
    base = slab_ref[O:, :]                                 # (1, TB)

    # hidden = leaky_relu(W_h @ x + b_h)   (negative_slope = 0.01, PyTorch default)
    h = jnp.dot(wht_ref[...], x, preferred_element_type=jnp.float32)   # (H, TB)  MXU
    h = h + bh_ref[...]
    h = jnp.where(h > 0.0, h, 0.01 * h)

    # output = w_out_h . hidden + (user_score + movie_score + b_out)
    y = jnp.sum(h * woh_ref[...], axis=0, keepdims=True)   # (1, TB)  VPU mul + XLU reduce
    out_ref[...] = (y + base).astype(out_ref.dtype)


def rec_forward(user_inp, movie_inp, others_inp, fp, *, tb_max=2048):
    """Forward pass using folded params `fp` (see fold_params). Returns (B,)."""
    B, O = others_inp.shape
    H = fp["w_hidden_t"].shape[0]

    TB = min(tb_max, _round_up(max(B, 1), 128))            # lane-multiple batch tile
    B_pad = _round_up(max(B, 1), TB)
    grid = (B_pad // TB,)

    # Folded embedding contribution: one scalar gather per example (not (B, E)).
    base = (jnp.take(fp["user_score"], user_inp, axis=0)
            + jnp.take(fp["movie_score"], movie_inp, axis=0)
            + fp["b_out"])                                  # (B,)

    # Single lane-dense slab: others^T stacked with the base row.
    slab = jnp.concatenate(
        [others_inp.astype(jnp.float32).T, base[None, :].astype(jnp.float32)],
        axis=0)                                             # (O+1, B)
    if B_pad != B:
        slab = jnp.pad(slab, ((0, 0), (0, B_pad - B)))      # (O+1, B_pad)

    out = pl.pallas_call(
        rec_kernel,
        out_shape=jax.ShapeDtypeStruct((1, B_pad), jnp.float32),
        grid=grid,
        in_specs=[
            pl.BlockSpec((O + 1, TB), lambda i: (0, i)),    # per-example slab, tiled on batch
            pl.BlockSpec((H, O), lambda i: (0, 0)),         # weights: resident across steps
            pl.BlockSpec((H, 1), lambda i: (0, 0)),
            pl.BlockSpec((H, 1), lambda i: (0, 0)),
        ],
        out_specs=pl.BlockSpec((1, TB), lambda i: (0, i)),  # lane-dense output
        compiler_params=pltpu.CompilerParams(
            dimension_semantics=("parallel",)),             # v7x: shard batch over 2 TCs
    )(slab, fp["w_hidden_t"], fp["b_hidden"], fp["w_out_h"])

    return out[0, :B]                                       # torch.flatten(x)


def init_params(key, n_users, n_movies, n_others, embedding_dim, hidden_dim):
    ks = jax.random.split(key, 6)
    E, H, O = embedding_dim, hidden_dim, n_others
    user_table = jax.random.normal(ks[0], (n_users, E), jnp.float32)
    movie_table = jax.random.normal(ks[1], (n_movies, E), jnp.float32)
    w_hidden = jax.random.normal(ks[2], (O, H), jnp.float32) * (1.0 / jnp.sqrt(O))
    b_hidden = jax.random.normal(ks[3], (1, H), jnp.float32) * 0.01
    w_out = jax.random.normal(ks[4], (2 * E + H, 1), jnp.float32) * (1.0 / jnp.sqrt(2 * E + H))
    b_out = jax.random.normal(ks[5], (1, 1), jnp.float32) * 0.01
    return {
        "user_table": user_table,
        "movie_table": movie_table,
        "w_hidden": w_hidden,
        "b_hidden": b_hidden,
        "w_out_u": w_out[:E],
        "w_out_m": w_out[E:2 * E],
        "w_out_h": w_out[2 * E:],
        "b_out": b_out,
    }


def fold_params(params):
    """One-time fold of the output layer into the embedding tables (inference-time constants)."""
    # Exact f32 elementwise-multiply + reduce (no matmul precision surprises).
    user_score = jnp.sum(params["user_table"] * params["w_out_u"][:, 0][None, :], axis=1)
    movie_score = jnp.sum(params["movie_table"] * params["w_out_m"][:, 0][None, :], axis=1)
    return {
        "user_score": user_score,                        # (n_users,)
        "movie_score": movie_score,                      # (n_movies,)
        "w_hidden_t": params["w_hidden"].T,              # (H, O)
        "b_hidden": params["b_hidden"].reshape(-1, 1),   # (H, 1)
        "w_out_h": params["w_out_h"],                    # (H, 1)
        "b_out": params["b_out"][0, 0],                  # scalar
    }


def rec_forward_ref(user_inp, movie_inp, others_inp, params):
    """Pure-JAX reference mirroring the PyTorch module."""
    u = jnp.take(params["user_table"], user_inp, axis=0)
    m = jnp.take(params["movie_table"], movie_inp, axis=0)
    h = others_inp @ params["w_hidden"] + params["b_hidden"]
    h = jnp.where(h > 0, h, 0.01 * h)
    x = jnp.concatenate([u, m, h], axis=1)
    w_out = jnp.concatenate([params["w_out_u"], params["w_out_m"], params["w_out_h"]], axis=0)
    return (x @ w_out + params["b_out"][0, 0]).reshape(-1)


if __name__ == "__main__":
    # Small shapes consistent with the module.
    B = 8
    n_users, n_movies, n_others = 50, 40, 16
    embedding_dim, hidden_dim = 8, 32

    key = jax.random.PRNGKey(0)
    k_params, k_u, k_m, k_o = jax.random.split(key, 4)

    params = init_params(k_params, n_users, n_movies, n_others, embedding_dim, hidden_dim)
    folded = fold_params(params)

    user_inp = jax.random.randint(k_u, (B,), 0, n_users, dtype=jnp.int32)
    movie_inp = jax.random.randint(k_m, (B,), 0, n_movies, dtype=jnp.int32)
    others_inp = jax.random.normal(k_o, (B, n_others), jnp.float32)

    out = jax.block_until_ready(rec_forward(user_inp, movie_inp, others_inp, folded))
    ref = jax.block_until_ready(rec_forward_ref(user_inp, movie_inp, others_inp, params))

    assert out.shape == (B,)
    assert jnp.allclose(out, ref, atol=1e-5, rtol=1e-5)
    print("KERNEL_OK")
</pallas_src>

<mosaic_0001>
module attributes {stable_mosaic.version = 11 : i64} {
  func.func @rec_kernel(%arg0: i32, %arg1: memref<17x128xf32, #tpu.memory_space<vmem>>, %arg2: memref<32x16xf32, #tpu.memory_space<vmem>>, %arg3: memref<32x1xf32, #tpu.memory_space<vmem>>, %arg4: memref<32x1xf32, #tpu.memory_space<vmem>>, %arg5: memref<1x128xf32, #tpu.memory_space<vmem>>) attributes {dimension_semantics = [#tpu.dimension_semantics<parallel>], iteration_bounds = array<i64: 1>, scalar_prefetch = 0 : i64, scratch_operands = 0 : i64, tpu.core_type = #tpu.core_type<tc>, window_params = [{transform_indices = @transform_0, window_bounds = array<i64: 17, 128>}, {pipeline_mode = #tpu.pipeline_mode<synchronous>, transform_indices = @transform_1, window_bounds = array<i64: 32, 16>}, {pipeline_mode = #tpu.pipeline_mode<synchronous>, transform_indices = @transform_2, window_bounds = array<i64: 32, 1>}, {pipeline_mode = #tpu.pipeline_mode<synchronous>, transform_indices = @transform_3, window_bounds = array<i64: 32, 1>}, {transform_indices = @transform_4, window_bounds = array<i64: 1, 128>}]} {
    %c0 = arith.constant 0 : index
    %c0_0 = arith.constant 0 : index
    %0 = vector.load %arg1[%c0, %c0_0] : memref<17x128xf32, #tpu.memory_space<vmem>>, vector<16x128xf32>
    %c16 = arith.constant 16 : index
    %c0_1 = arith.constant 0 : index
    %1 = vector.load %arg1[%c16, %c0_1] : memref<17x128xf32, #tpu.memory_space<vmem>>, vector<1x128xf32>
    %c0_2 = arith.constant 0 : index
    %c0_3 = arith.constant 0 : index
    %2 = vector.load %arg2[%c0_2, %c0_3] : memref<32x16xf32, #tpu.memory_space<vmem>>, vector<32x16xf32>
    %cst = arith.constant dense<0.000000e+00> : vector<32x128xf32>
    %3 = tpu.matmul %2, %0, %cst {dimension_numbers = #tpu.dot_dimension_numbers<[1], [0], [0], [1], [0, 0, 1, 1], [], []>} : vector<32x16xf32>, vector<16x128xf32>, vector<32x128xf32> -> vector<32x128xf32>
    %c0_4 = arith.constant 0 : index
    %c0_5 = arith.constant 0 : index
    %4 = vector.load %arg3[%c0_4, %c0_5] : memref<32x1xf32, #tpu.memory_space<vmem>>, vector<32x1xf32>
    %5 = vector.broadcast %4 : vector<32x1xf32> to vector<32x128xf32>
    %6 = arith.addf %3, %5 : vector<32x128xf32>
    %cst_6 = arith.constant 0.000000e+00 : f32
    %7 = vector.broadcast %cst_6 : f32 to vector<32x128xf32>
    %8 = arith.cmpf ogt, %6, %7 : vector<32x128xf32>
    %cst_7 = arith.constant 0.00999999977 : f32
    %9 = vector.broadcast %cst_7 : f32 to vector<32x128xf32>
    %10 = arith.mulf %9, %6 : vector<32x128xf32>
    %11 = arith.select %8, %6, %10 : vector<32x128xi1>, vector<32x128xf32>
    %c0_8 = arith.constant 0 : index
    %c0_9 = arith.constant 0 : index
    %12 = vector.load %arg4[%c0_8, %c0_9] : memref<32x1xf32, #tpu.memory_space<vmem>>, vector<32x1xf32>
    %13 = vector.broadcast %12 : vector<32x1xf32> to vector<32x128xf32>
    %14 = arith.mulf %11, %13 : vector<32x128xf32>
    %cst_10 = arith.constant dense<0.000000e+00> : vector<128xf32>
    %15 = vector.multi_reduction <add>, %14, %cst_10 [0] : vector<32x128xf32> to vector<128xf32>
    %16 = vector.shape_cast %15 : vector<128xf32> to vector<1x128xf32>
    %17 = arith.addf %16, %1 : vector<1x128xf32>
    %c0_11 = arith.constant 0 : index
    %c0_12 = arith.constant 0 : index
    %18 = vector.load %arg5[%c0_11, %c0_12] : memref<1x128xf32, #tpu.memory_space<vmem>>, vector<1x128xf32>
    tpu.vector_store %arg5[%c0_11, %c0_12], %17 {strides = array<i32>} : memref<1x128xf32, #tpu.memory_space<vmem>>, vector<1x128xf32>,
    return
  }
  func.func @transform_0(%arg0: i32) -> (i32, i32) {
    %c0_i32 = arith.constant 0 : i32
    %c0_i32_0 = arith.constant 0 : i32
    return %c0_i32, %arg0 : i32, i32
  }
  func.func @transform_1(%arg0: i32) -> (i32, i32) {
    %c0_i32 = arith.constant 0 : i32
    %c0_i32_0 = arith.constant 0 : i32
    %c0_i32_1 = arith.constant 0 : i32
    return %c0_i32, %c0_i32_0 : i32, i32
  }
  func.func @transform_2(%arg0: i32) -> (i32, i32) {
    %c0_i32 = arith.constant 0 : i32
    %c0_i32_0 = arith.constant 0 : i32
    %c0_i32_1 = arith.constant 0 : i32
    return %c0_i32, %c0_i32_0 : i32, i32
  }
  func.func @transform_3(%arg0: i32) -> (i32, i32) {
    %c0_i32 = arith.constant 0 : i32
    %c0_i32_0 = arith.constant 0 : i32
    %c0_i32_1 = arith.constant 0 : i32
    return %c0_i32, %c0_i32_0 : i32, i32
  }
  func.func @transform_4(%arg0: i32) -> (i32, i32) {
    %c0_i32 = arith.constant 0 : i32
    %c0_i32_0 = arith.constant 0 : i32
    return %c0_i32, %arg0 : i32, i32
  }
}

</mosaic_0001>

<llo_original>
// kernel: tpu_custom_call.1
$region0: #{tpu_custom_call.1}
  #allocation0 [shape = 'u32[]', space=smem, size = 0x4, offset = 0x4, fixed_abs, tag = 'smem constant byte address 0x4 - core index']
  #allocation1 [shape = 'u32[144,128]{1,0:T(1,128)}', space=vmem, size = 0x12000, scoped, tag = 'internal scratch']
  %s0 = inlined_call_operand.vmem [shape: f32[17,128], index: 0, kind: input, shape index: {}]
  %s1 = inlined_call_operand.vmem [shape: f32[32,16], index: 1, kind: input, shape index: {}]
  %s2 = inlined_call_operand.vmem [shape: f32[32,1], index: 2, kind: input, shape index: {}]
  %s3 = inlined_call_operand.vmem [shape: f32[32,1], index: 3, kind: input, shape index: {}]
  %s4 = inlined_call_operand.hbm [shape: f32[1,128], index: 4, kind: output, shape index: {}]
  %s5 = sld [smem:[#allocation0]]
  $region26: #{tpu_custom_call.1} parent=0
    _
  %s7 = ssub.s32 1, %s5
  %s8 = scalar_select 0, %s7, %s5
  $region1: #{tpu_custom_call.1} parent=0
    #allocation2 [shape = 'u8[512]{0}', space=vmem, size = 0x400, scoped, tag = 'output window, operand 0, single buffered']
    #allocation3 [shape = 's32[1]{0}', space=sflag, size = 0x4, scoped, tag = 'scoped memory for tpu_custom_call.1']
    %9 = vsyncpa [#allocation3], 0
    // Predicated region
    $region2: #{tpu_custom_call.1} parent=1 // pred_check
      _
    $region3: #{tpu_custom_call.1} parent=1 // pred_check_branch
      %11 = sbr.rel (0) target = $region5
    $region4: #{tpu_custom_call.1} parent=1 // pred_region
      _
    $region5: #{tpu_custom_call.1} parent=1 // pred_fallthru
      _
    // Predicated region
    $region6: #{tpu_custom_call.1} parent=1 // pred_check
      _
    $region7: #{tpu_custom_call.1} parent=1 // pred_check_branch
      %13 = sbr.rel (0) target = $region9
    $region8: #{tpu_custom_call.1} parent=1 // pred_region
      _
    $region9: #{tpu_custom_call.1} parent=1 // pred_fallthru
      _
    // Predicated region
    $region10: #{tpu_custom_call.1} parent=1 // pred_check
      _
    $region11: #{tpu_custom_call.1} parent=1 // pred_check_branch
      %15 = sbr.rel (0) target = $region13
    $region12: #{tpu_custom_call.1} parent=1 // pred_region
      _
    $region13: #{tpu_custom_call.1} parent=1 // pred_fallthru
      _
    // Predicated region
    $region14: #{tpu_custom_call.1} parent=1 // pred_check
      _
    $region15: #{tpu_custom_call.1} parent=1 // pred_check_branch
      %17 = sbr.rel (0) target = $region17
    $region16: #{tpu_custom_call.1} parent=1 // pred_region
      _
    $region17: #{tpu_custom_call.1} parent=1 // pred_fallthru
      _
    %v18 = vld [vmem:[%s0] sm:$0xff]
    %v19 = vld [vmem:[%s0 + $0x8] sm:$0xff]
    %v20 = vld [vmem:[%s0 + $0x10] sm:$0x1]
    %v21 = vld [vmem:[%s1] sm:$0xff]
    %v22 = vld [vmem:[%s1 + $0x8] sm:$0xff]
    %v23 = vld [vmem:[%s1 + $0x10] sm:$0xff]
    %v24 = vld [vmem:[%s1 + $0x18] sm:$0xff]
    %v25 = vld [vmem:[%s2] sm:$0xff]
    %v26 = vld [vmem:[%s2 + $0x8] sm:$0xff]
    %v27 = vld [vmem:[%s2 + $0x10] sm:$0xff]
    %v28 = vld [vmem:[%s2 + $0x18] sm:$0xff]
    %30 = vset.pattern.permute.xlu0 0
    %31 = vperm.xlu0 %30, %v25
    %v32 = vpop.permute.xlu0 %31
    %35 = vset.pattern.permute.xlu0 0
    %36 = vperm.xlu0 %35, %v26
    %v37 = vpop.permute.xlu0 %36
    %40 = vset.pattern.permute.xlu0 0
    %41 = vperm.xlu0 %40, %v27
    %v42 = vpop.permute.xlu0 %41
    %45 = vset.pattern.permute.xlu0 0
    %46 = vperm.xlu0 %45, %v28
    %v47 = vpop.permute.xlu0 %46
    %vm49 = vcmask 130048
    %v51 = vsel %vm49, %v21, 0
    %v54 = vsel %vm49, %v22, 0
    %v57 = vsel %vm49, %v23, 0
    %v60 = vsel %vm49, %v24, 0
    %62 = vmatprep.subr.mxu0 0.0
    %63 = vmatpush1.msra.mxu0 %v18
    %64 = vmatprep.subr.mxu0 0.0
    %65 = vmatpush1.msra.mxu0 %v19
    %66 = vmatprep.subr.mxu0 0.0
    %67 = vmatpush1.msra.mxu0 0.0
    %68 = vmatprep.subr.mxu0 0.0
    %69 = vmatpush1.msra.mxu0 0.0
    %70 = vmatprep.subr.mxu0 0.0
    %71 = vmatpush1.msra.mxu0 0.0
    %72 = vmatprep.subr.mxu0 0.0
    %73 = vmatpush1.msra.mxu0 0.0
    %74 = vmatprep.subr.mxu0 0.0
    %75 = vmatpush1.msra.mxu0 0.0
    %76 = vmatprep.subr.mxu0 0.0
    %77 = vmatpush1.msra.mxu0 0.0
    %78 = vmatprep.subr.mxu0 0.0
    %79 = vmatpush1.msra.mxu0 0.0
    %80 = vmatprep.subr.mxu0 0.0
    %81 = vmatpush1.msra.mxu0 0.0
    %82 = vmatprep.subr.mxu0 0.0
    %83 = vmatpush1.msra.mxu0 0.0
    %84 = vmatprep.subr.mxu0 0.0
    %85 = vmatpush1.msra.mxu0 0.0
    %86 = vmatprep.subr.mxu0 0.0
    %87 = vmatpush1.msra.mxu0 0.0
    %88 = vmatprep.subr.mxu0 0.0
    %89 = vmatpush1.msra.mxu0 0.0
    %90 = vmatprep.subr.mxu0 0.0
    %91 = vmatpush1.msra.mxu0 0.0
    %92 = vmatprep.subr.mxu0 0.0
    %93 = vmatpush1.msra.mxu0 0.0
    %94 = vmatprep.subr.mxu0 0.0
    %95 = vmatpush1.msra.mxu0 0.0
    %96 = vmatprep.subr.mxu0 0.0
    %97 = vmatpush1.msra.mxu0 0.0
    %98 = vmatprep.subr.mxu0 0.0
    %99 = vmatpush1.msra.mxu0 0.0
    %100 = vmatprep.subr.mxu0 0.0
    %101 = vmatpush1.msra.mxu0 0.0
    %102 = vmatprep.subr.mxu0 0.0
    %103 = vmatpush1.msra.mxu0 0.0
    %104 = vmatprep.subr.mxu0 0.0
    %105 = vmatpush1.msra.mxu0 0.0
    %106 = vmatprep.subr.mxu0 0.0
    %107 = vmatpush1.msra.mxu0 0.0
    %108 = vmatprep.subr.mxu0 0.0
    %109 = vmatpush1.msra.mxu0 0.0
    %110 = vmatprep.subr.mxu0 0.0
    %111 = vmatpush1.msra.mxu0 0.0
    %112 = vmatprep.subr.mxu0 0.0
    %113 = vmatpush1.msra.mxu0 0.0
    %114 = vmatprep.subr.mxu0 0.0
    %115 = vmatpush1.msra.mxu0 0.0
    %116 = vmatprep.subr.mxu0 0.0
    %117 = vmatpush1.msra.mxu0 0.0
    %118 = vmatprep.subr.mxu0 0.0
    %119 = vmatpush1.msra.mxu0 0.0
    %120 = vmatprep.subr.mxu0 0.0
    %121 = vmatpush1.msra.mxu0 0.0
    %122 = vmatprep.subr.mxu0 0.0
    %123 = vmatpush1.msra.mxu0 0.0
    %124 = vmatprep.subr.mxu0 0.0
    %125 = vmatpush1.msra.mxu0 0.0
    %126 = vmatprep.mubr.f32.mxu0 0.0
    %127 = vmatmul.mubr.f32.gmra.mrb[0].mxu0 %v51
    %v128 = vpop.f32.mrb[0].mxu0
    %v129 = vadd.f32 %v32, %v128
    %v130 = vpop.f32.mrb[0].mxu0
    %131 = vmatprep.mubr.f32.mxu0 0.0
    %132 = vmatmul.mubr.f32.gmra.mrb[0].mxu0 %v54
    %v133 = vpop.f32.mrb[0].mxu0
    %v134 = vadd.f32 %v37, %v133
    %v135 = vpop.f32.mrb[0].mxu0
    %136 = vmatprep.mubr.f32.mxu0 0.0
    %137 = vmatmul.mubr.f32.gmra.mrb[0].mxu0 %v57
    %v138 = vpop.f32.mrb[0].mxu0
    %v139 = vadd.f32 %v42, %v138
    %v140 = vpop.f32.mrb[0].mxu0
    %141 = vmatprep.mubr.f32.mxu0 0.0
    %142 = vmatmul.mubr.f32.gmra.mrb[0].mxu0 %v60
    %v143 = vpop.f32.mrb[0].mxu0
    %v144 = vadd.f32 %v47, %v143
    %v145 = vpop.f32.mrb[0].mxu0
    %146 = vdwg.mxu0
    %vm147 = vcmp.gt.f32.partialorder %v129, 0.0
    %vm148 = vcmp.gt.f32.partialorder %v134, 0.0
    %vm149 = vcmp.gt.f32.partialorder %v139, 0.0
    %vm150 = vcmp.gt.f32.partialorder %v144, 0.0
    %v151 = vmul.f32 %v129, 0.01
    %v152 = vmul.f32 %v134, 0.01
    %v153 = vmul.f32 %v139, 0.01
    %v154 = vmul.f32 %v144, 0.01
    %v155 = vsel %vm147, %v129, %v151
    %v156 = vsel %vm148, %v134, %v152
    %v157 = vsel %vm149, %v139, %v153
    %v158 = vsel %vm150, %v144, %v154
    %v159 = vld [vmem:[%s3] sm:$0xff]
    %v160 = vld [vmem:[%s3 + $0x8] sm:$0xff]
    %v161 = vld [vmem:[%s3 + $0x10] sm:$0xff]
    %v162 = vld [vmem:[%s3 + $0x18] sm:$0xff]
    %164 = vset.pattern.permute.xlu0 0
    %165 = vperm.xlu0 %164, %v159
    %v166 = vpop.permute.xlu0 %165
    %169 = vset.pattern.permute.xlu0 0
    %170 = vperm.xlu0 %169, %v160
    %v171 = vpop.permute.xlu0 %170
    %174 = vset.pattern.permute.xlu0 0
    %175 = vperm.xlu0 %174, %v161
    %v176 = vpop.permute.xlu0 %175
    %179 = vset.pattern.permute.xlu0 0
    %180 = vperm.xlu0 %179, %v162
    %v181 = vpop.permute.xlu0 %180
    %v183 = vmul.f32 %v155, %v166
    %v184 = vmul.f32 %v156, %v171
    %v185 = vmul.f32 %v157, %v176
    %v186 = vmul.f32 %v158, %v181
    %v187 = vadd.f32 %v183, %v184
    %v188 = vadd.f32 %v187, %v185
    %v189 = vadd.f32 %v188, %v186
    %v190 = vrot.slane %v189, 4
    %v191 = vadd.f32 %v189, %v190
    %v192 = vrot.slane %v191, 2
    %v193 = vadd.f32 %v191, %v192
    %v194 = vrot.slane %v193, 1
    %v195 = vadd.f32 %v193, %v194
    %v196 = vadd.f32 %v195, %v20
    %197 = vst [vmem:[#allocation2] sm:$0x1] %v196
    // Predicated region
    $region18: #{tpu_custom_call.1} parent=1 // pred_check
      _
    $region19: #{tpu_custom_call.1} parent=1 // pred_check_branch
      %199 = sbr.rel (0) target = $region21
    $region20: #{tpu_custom_call.1} parent=1 // pred_region
      %s201 = ssub.s32 16, 16
      %202 = vsyncadd [#allocation3], %s201
      %s204 = sshll.u32 [#allocation2], 4
      %s205 = int_to_ptr.vmem [resolvable:$true] %s204
      %207 = dma.vmem_to_hbm [thread:$0]  %s205, 16, %s4, [#allocation3]
    $region21: #{tpu_custom_call.1} parent=1 // pred_fallthru
      _
    // Predicated region
    $region22: #{tpu_custom_call.1} parent=1 // pred_check
      _
    $region23: #{tpu_custom_call.1} parent=1 // pred_check_branch
      %209 = sbr.rel (0) target = $region25
    $region24: #{tpu_custom_call.1} parent=1 // pred_region
      %210 = dma.done [#allocation3], 16
    $region25: #{tpu_custom_call.1} parent=1 // pred_fallthru
      _
    %211 = vsyncpa [#allocation3], 1

</llo_original>
